<compile_context>
chip_gen: v5e
topology: v5e:2x2
jax: 0.10.0
libtpu: 0.0.40
codegen_flags: <defaults>
</compile_context>

<pallas_src>
import jax
import jax.numpy as jnp
from jax.experimental import pallas as pl
from jax.experimental.pallas import tpu as pltpu


def _binary_classifier_kernel(w_ref, b_ref, x_ref, o_ref):
    # w_ref: SMEM (2,)   b_ref: SMEM (1,)
    # x_ref: VMEM (2, TR, C)  one dense (sublane=TR, lane=C) slab per feature
    # o_ref: VMEM (TR, C)
    w0 = w_ref[0]
    w1 = w_ref[1]
    bias = b_ref[0]
    # Pure VPU multiply-add; scalars broadcast over the dense tile.
    logits = x_ref[0] * w0 + x_ref[1] * w1 + bias
    # Compute in f32, cast only at the store (free under the memory roofline,
    # and required on v5e which has no bf16 VPU/EUP).
    o_ref[...] = jax.nn.sigmoid(logits).astype(o_ref.dtype)


def binary_classifier(x, w, b, *, lane_width=512, target_block_elems=256 * 1024,
                      out_dtype=jnp.float32):
    """sigmoid(x @ w + b) with a dense (sublane, lane) TPU layout.

    x: (B, 2) float32
    w: (2, 1) float32  (transpose of PyTorch's (out=1, in=2) weight)
    b: (1, 1) float32
    lane_width: C, lane extent of the dense slab (multiple of 128).
    target_block_elems: elements per grid step (~256K => ~2 MiB x-slab + 1 MiB
        out per buffer; ~6 MiB double-buffered — safe on v7x's smaller VMEM,
        comfortably amortizes the ~0.35 us per-step overhead on v5e/v6e).
    out_dtype: output dtype (f32 default; bf16 halves writeback bytes if the
        consumer tolerates it).
    returns: (B, 1) out_dtype
    """
    B = x.shape[0]
    C = max(128, (lane_width // 128) * 128)

    # Rows of the dense slab; round to a multiple of 8 sublanes.
    R = pl.cdiv(B, C)
    R8 = ((R + 7) // 8) * 8
    # Sublane tile height: multiple of 8, sized so TR*C ~= target_block_elems.
    TR = max(8, min(((target_block_elems // C) // 8) * 8, R8))
    n_blocks = pl.cdiv(R8, TR)
    R_pad = n_blocks * TR
    total = R_pad * C

    # Layout plumbing (one fused transpose+pad+reshape chain; no compute here).
    xt = jnp.pad(x.astype(jnp.float32).T, ((0, 0), (0, total - B)))
    xt = xt.reshape(2, R_pad, C)                                   # (2, R_pad, C)
    w_s = w.reshape(2).astype(jnp.float32)                         # SMEM scalars
    b_s = b.reshape(1).astype(jnp.float32)

    out = pl.pallas_call(
        _binary_classifier_kernel,
        out_shape=jax.ShapeDtypeStruct((R_pad, C), out_dtype),
        grid_spec=pltpu.PrefetchScalarGridSpec(
            num_scalar_prefetch=0,
            grid=(n_blocks,),
            in_specs=[
                pl.BlockSpec(memory_space=pltpu.MemorySpace.SMEM),   # w (2,)
                pl.BlockSpec(memory_space=pltpu.MemorySpace.SMEM),   # b (1,)
                pl.BlockSpec((2, TR, C), lambda i: (0, i, 0)),       # x slab
            ],
            out_specs=pl.BlockSpec((TR, C), lambda i: (i, 0)),
        ),
        compiler_params=pltpu.CompilerParams(
            # Batch axis is fully independent -> shards across the 2 TensorCores
            # on v7x; no-op on single-TC v5e/v6e.
            dimension_semantics=("parallel",)),
        cost_estimate=pl.CostEstimate(
            flops=3 * total,
            transcendentals=total,
            bytes_accessed=12 * total),
    )(w_s, b_s, xt)

    # Padded tail (sigmoid(b) on zero inputs) is sliced off before the reshape.
    return out.reshape(-1)[:B].reshape(B, 1)


def _reference(x, w, b):
    return jax.nn.sigmoid(x @ w + b)


if __name__ == "__main__":
    key = jax.random.PRNGKey(0)
    kx, kw, kb = jax.random.split(key, 3)

    B = 8  # small batch for the test; at this size the op is pure launch
           # overhead — in a real model this epilogue should be fused into
           # whatever kernel produces x.
    x = jax.random.normal(kx, (B, 2), dtype=jnp.float32)

    # Deterministic parameter init (matches nn.Linear(2, 1) shapes):
    # PyTorch weight shape is (1, 2); we keep it transposed as (2, 1).
    w = jax.random.normal(kw, (2, 1), dtype=jnp.float32) * 0.5
    b = jax.random.normal(kb, (1, 1), dtype=jnp.float32) * 0.1

    out = binary_classifier(x, w, b)
    jax.block_until_ready(out)

    ref = _reference(x, w, b)
    assert out.shape == (B, 1)
    assert jnp.allclose(out, ref, atol=1e-6), (out, ref)

    print("KERNEL_OK")
</pallas_src>

<mosaic_0001>
module attributes {stable_mosaic.version = 11 : i64} {
  func.func @_binary_classifier_kernel(%arg0: i32, %arg1: memref<2xf32, #tpu.memory_space<smem>>, %arg2: memref<1xf32, #tpu.memory_space<smem>>, %arg3: memref<2x8x512xf32, #tpu.memory_space<vmem>>, %arg4: memref<8x512xf32, #tpu.memory_space<vmem>>) attributes {dimension_semantics = [#tpu.dimension_semantics<parallel>], iteration_bounds = array<i64: 1>, scalar_prefetch = 0 : i64, scratch_operands = 0 : i64, tpu.core_type = #tpu.core_type<tc>, window_params = [{transform_indices = @transform_0, window_bounds = array<i64: 2>}, {transform_indices = @transform_1, window_bounds = array<i64: 1>}, {transform_indices = @transform_2, window_bounds = array<i64: 2, 8, 512>}, {transform_indices = @transform_3, window_bounds = array<i64: 8, 512>}]} {
    %c0 = arith.constant 0 : index
    %0 = memref.load %arg1[%c0] : memref<2xf32, #tpu.memory_space<smem>>
    %c1 = arith.constant 1 : index
    %1 = memref.load %arg1[%c1] : memref<2xf32, #tpu.memory_space<smem>>
    %c0_0 = arith.constant 0 : index
    %2 = memref.load %arg2[%c0_0] : memref<1xf32, #tpu.memory_space<smem>>
    %c0_1 = arith.constant 0 : index
    %c0_2 = arith.constant 0 : index
    %c0_3 = arith.constant 0 : index
    %3 = vector.load %arg3[%c0_1, %c0_2, %c0_3] : memref<2x8x512xf32, #tpu.memory_space<vmem>>, vector<1x8x512xf32>
    %4 = vector.shape_cast %3 : vector<1x8x512xf32> to vector<8x512xf32>
    %5 = vector.broadcast %0 : f32 to vector<8x512xf32>
    %6 = arith.mulf %4, %5 : vector<8x512xf32>
    %c1_4 = arith.constant 1 : index
    %c0_5 = arith.constant 0 : index
    %c0_6 = arith.constant 0 : index
    %7 = vector.load %arg3[%c1_4, %c0_5, %c0_6] : memref<2x8x512xf32, #tpu.memory_space<vmem>>, vector<1x8x512xf32>
    %8 = vector.shape_cast %7 : vector<1x8x512xf32> to vector<8x512xf32>
    %9 = vector.broadcast %1 : f32 to vector<8x512xf32>
    %10 = arith.mulf %8, %9 : vector<8x512xf32>
    %11 = arith.addf %6, %10 : vector<8x512xf32>
    %12 = vector.broadcast %2 : f32 to vector<8x512xf32>
    %13 = arith.addf %11, %12 : vector<8x512xf32>
    %14 = arith.negf %13 : vector<8x512xf32>
    %15 = math.exp %14 : vector<8x512xf32>
    %cst = arith.constant 1.000000e+00 : f32
    %16 = vector.broadcast %cst : f32 to vector<8x512xf32>
    %17 = arith.addf %16, %15 : vector<8x512xf32>
    %18 = arith.divf %16, %17 : vector<8x512xf32>
    %c0_7 = arith.constant 0 : index
    %c0_8 = arith.constant 0 : index
    %19 = vector.load %arg4[%c0_7, %c0_8] : memref<8x512xf32, #tpu.memory_space<vmem>>, vector<8x512xf32>
    tpu.vector_store %arg4[%c0_7, %c0_8], %18 {strides = array<i32>} : memref<8x512xf32, #tpu.memory_space<vmem>>, vector<8x512xf32>,
    return
  }
  func.func @transform_0(%arg0: i32) -> i32 {
    %c0_i32 = arith.constant 0 : i32
    %c0_i32_0 = arith.constant 0 : i32
    return %c0_i32 : i32
  }
  func.func @transform_1(%arg0: i32) -> i32 {
    %c0_i32 = arith.constant 0 : i32
    %c0_i32_0 = arith.constant 0 : i32
    return %c0_i32 : i32
  }
  func.func @transform_2(%arg0: i32) -> (i32, i32, i32) {
    %c0_i32 = arith.constant 0 : i32
    %c0_i32_0 = arith.constant 0 : i32
    %c0_i32_1 = arith.constant 0 : i32
    return %c0_i32, %arg0, %c0_i32_0 : i32, i32, i32
  }
  func.func @transform_3(%arg0: i32) -> (i32, i32) {
    %c0_i32 = arith.constant 0 : i32
    %c0_i32_0 = arith.constant 0 : i32
    return %arg0, %c0_i32 : i32, i32
  }
}

</mosaic_0001>

<llo_original>
// kernel: tpu_custom_call.1
$region0: #{tpu_custom_call.1}
  #allocation0 [shape = 'u32[]', space=smem, size = 0x4, offset = 0x4, fixed_abs, tag = 'smem constant byte address 0x4 - core index']
  #allocation1 [shape = 'u32[72,128]{1,0:T(1,128)}', space=vmem, size = 0x9000, scoped, tag = 'internal scratch']
  #allocation2 [shape = 'f32[1]{0:T(128)S(6)}', space=smem, size = 0x200, scoped, tag = 'scoped memory for tpu_custom_call.1']
  %s0 = inlined_call_operand.vmem [shape: f32[2], index: 0, kind: input, shape index: {}]
  %s1 = inlined_call_operand.<no memory space> [shape: f32[1], index: 1, kind: input, shape index: {}]
  %s2 = inlined_call_operand.hbm [shape: f32[2,8,512], index: 2, kind: input, shape index: {}]
  %s3 = inlined_call_operand.hbm [shape: f32[8,512], index: 3, kind: output, shape index: {}]
  %s4 = sld [smem:[#allocation0]]
  $region30: #{tpu_custom_call.1} parent=0
    _
  %s6 = ssub.s32 1, %s4
  %s7 = scalar_select 0, %s6, %s4
  %8 = sst [smem:[#allocation2]] %s1
  $region1: #{tpu_custom_call.1} parent=0
    #allocation3 [shape = 'u8[512]{0}', space=smem, size = 0x200, scoped, tag = 'input window, operand 0, single buffered']
    #allocation4 [shape = 's32[1]{0}', space=sflag, size = 0x4, scoped, tag = 'scoped memory for tpu_custom_call.1']
    #allocation5 [shape = 's32[1]{0}', space=sflag, size = 0x4, scoped, tag = 'scoped memory for tpu_custom_call.1']
    #allocation6 [shape = 's32[1]{0}', space=sflag, size = 0x4, scoped, tag = 'scoped memory for tpu_custom_call.1']
    #allocation7 [shape = 'u8[32768]{0}', space=vmem, size = 0x8000, scoped, tag = 'input window, operand 2, single buffered']
    #allocation8 [shape = 'u8[16384]{0}', space=vmem, size = 0x4000, scoped, tag = 'output window, operand 0, single buffered']
    %9 = vsyncpa [#allocation6], 0
    %10 = vsyncpa [#allocation4], 0
    %11 = vsyncpa [#allocation5], 0
    // Predicated region
    $region2: #{tpu_custom_call.1} parent=1 // pred_check
      _
    $region3: #{tpu_custom_call.1} parent=1 // pred_check_branch
      %13 = sbr.rel (0) target = $region5
    $region4: #{tpu_custom_call.1} parent=1 // pred_region
      %15 = vsyncadd [#allocation6], 0
      %s17 = sshll.u32 %s0, 4
      %s18 = int_to_ptr.vmem [resolvable:$true] %s17
      %20 = dma.vmem_to_smem %s18, 16, [#allocation3], [#allocation6]
    $region5: #{tpu_custom_call.1} parent=1 // pred_fallthru
      _
    // Predicated region
    $region6: #{tpu_custom_call.1} parent=1 // pred_check
      _
    $region7: #{tpu_custom_call.1} parent=1 // pred_check_branch
      %22 = sbr.rel (0) target = $region9
    $region8: #{tpu_custom_call.1} parent=1 // pred_region
      _
    $region9: #{tpu_custom_call.1} parent=1 // pred_fallthru
      _
    // Predicated region
    $region10: #{tpu_custom_call.1} parent=1 // pred_check
      _
    $region11: #{tpu_custom_call.1} parent=1 // pred_check_branch
      %24 = sbr.rel (0) target = $region13
    $region12: #{tpu_custom_call.1} parent=1 // pred_region
      %26 = vsyncadd [#allocation4], 0
      %s27 = sshll.u32 %s2, 4
      %s28 = int_to_ptr.hbm [resolvable:$true] %s27
      %s29 = sshll.u32 [#allocation7], 4
      %s30 = int_to_ptr.vmem [resolvable:$true] %s29
      %35 = dma.hbm_to_vmem [thread:$0]  %s28, 1024, %s30, [#allocation4], 512, 512, 32
    $region13: #{tpu_custom_call.1} parent=1 // pred_fallthru
      _
    // Predicated region
    $region14: #{tpu_custom_call.1} parent=1 // pred_check
      _
    $region15: #{tpu_custom_call.1} parent=1 // pred_check_branch
      %37 = sbr.rel (0) target = $region17
    $region16: #{tpu_custom_call.1} parent=1 // pred_region
      %39 = dma.done [#allocation6], 16
    $region17: #{tpu_custom_call.1} parent=1 // pred_fallthru
      _
    // Predicated region
    $region18: #{tpu_custom_call.1} parent=1 // pred_check
      _
    $region19: #{tpu_custom_call.1} parent=1 // pred_check_branch
      %41 = sbr.rel (0) target = $region21
    $region20: #{tpu_custom_call.1} parent=1 // pred_region
      %43 = dma.done [#allocation4], 1024
    $region21: #{tpu_custom_call.1} parent=1 // pred_fallthru
      _
    %44 = sfence
    %s45 = sld [smem:[#allocation3]]
    %s46 = sld [smem:[#allocation3 + $0x1]]
    %s47 = sld [smem:[#allocation2]]
    %v48 = vld [vmem:[#allocation7] sm:$0xff]
    %v49 = vld [vmem:[#allocation7 + $0x8] sm:$0xff]
    %v50 = vld [vmem:[#allocation7 + $0x10] sm:$0xff]
    %v51 = vld [vmem:[#allocation7 + $0x18] sm:$0xff]
    %v52 = vstv %s45
    %v53 = vmul.f32 %v48, %v52
    %v54 = vmul.f32 %v49, %v52
    %v55 = vmul.f32 %v50, %v52
    %v56 = vmul.f32 %v51, %v52
    %s57 = scalar_lea.vmem [#allocation7], 32
    %v58 = vld [vmem:[%s57] sm:$0xff]
    %v59 = vld [vmem:[%s57 + $0x8] sm:$0xff]
    %v60 = vld [vmem:[%s57 + $0x10] sm:$0xff]
    %v61 = vld [vmem:[%s57 + $0x18] sm:$0xff]
    %v62 = vstv %s46
    %v63 = vmul.f32 %v58, %v62
    %v64 = vmul.f32 %v59, %v62
    %v65 = vmul.f32 %v60, %v62
    %v66 = vmul.f32 %v61, %v62
    %v67 = vadd.f32 %v53, %v63
    %v68 = vadd.f32 %v54, %v64
    %v69 = vadd.f32 %v55, %v65
    %v70 = vadd.f32 %v56, %v66
    %v71 = vstv %s47
    %v72 = vadd.f32 %v67, %v71
    %v73 = vadd.f32 %v68, %v71
    %v74 = vadd.f32 %v69, %v71
    %v75 = vadd.f32 %v70, %v71
    %v76 = vxor.u32 %v72, 2147483648
    %v77 = vxor.u32 %v73, 2147483648
    %v78 = vxor.u32 %v74, 2147483648
    %v79 = vxor.u32 %v75, 2147483648
    %v80 = vmul.f32 %v76, 1.442695
    %v81 = vpow.pop %v80
    %v82 = vmul.f32 %v77, 1.442695
    %v83 = vpow.pop %v82
    %v84 = vmul.f32 %v78, 1.442695
    %v85 = vpow.pop %v84
    %v86 = vmul.f32 %v79, 1.442695
    %v87 = vpow.pop %v86
    %v88 = vadd.f32 %v81, 1.0
    %v89 = vadd.f32 %v83, 1.0
    %v90 = vadd.f32 %v85, 1.0
    %v91 = vadd.f32 %v87, 1.0
    %v92 = vrcp.pop %v88
    %v93 = vmul.f32 %v88, %v92
    %v94 = vsub.f32 1.0, %v93
    %v95 = vmul.f32 %v92, %v94
    %v96 = vadd.f32 %v92, %v95
    %vm97 = vweird.f32 %v88
    %vm98 = vweird.f32 %v92
    %vm99 = vmor %vm97, %vm98
    %v100 = vsel %vm99, %v92, %v96
    %v101 = vand.u32 2147483647, %v88
    %vm102 = vcmp.eq.f32.partialorder %v101, 8.507059e+37
    %v103 = vand.u32 %v88, 2147483648
    %v104 = vor.u32 1.1754944e-38, %v103
    %v105 = vsel %vm102, %v104, %v100
    %v106 = vmul.f32 1.0, %v105
    %v107 = vrcp.pop %v89
    %v108 = vmul.f32 %v89, %v107
    %v109 = vsub.f32 1.0, %v108
    %v110 = vmul.f32 %v107, %v109
    %v111 = vadd.f32 %v107, %v110
    %vm112 = vweird.f32 %v89
    %vm113 = vweird.f32 %v107
    %vm114 = vmor %vm112, %vm113
    %v115 = vsel %vm114, %v107, %v111
    %v116 = vand.u32 2147483647, %v89
    %vm117 = vcmp.eq.f32.partialorder %v116, 8.507059e+37
    %v118 = vand.u32 %v89, 2147483648
    %v119 = vor.u32 1.1754944e-38, %v118
    %v120 = vsel %vm117, %v119, %v115
    %v121 = vmul.f32 1.0, %v120
    %v122 = vrcp.pop %v90
    %v123 = vmul.f32 %v90, %v122
    %v124 = vsub.f32 1.0, %v123
    %v125 = vmul.f32 %v122, %v124
    %v126 = vadd.f32 %v122, %v125
    %vm127 = vweird.f32 %v90
    %vm128 = vweird.f32 %v122
    %vm129 = vmor %vm127, %vm128
    %v130 = vsel %vm129, %v122, %v126
    %v131 = vand.u32 2147483647, %v90
    %vm132 = vcmp.eq.f32.partialorder %v131, 8.507059e+37
    %v133 = vand.u32 %v90, 2147483648
    %v134 = vor.u32 1.1754944e-38, %v133
    %v135 = vsel %vm132, %v134, %v130
    %v136 = vmul.f32 1.0, %v135
    %v137 = vrcp.pop %v91
    %v138 = vmul.f32 %v91, %v137
    %v139 = vsub.f32 1.0, %v138
    %v140 = vmul.f32 %v137, %v139
    %v141 = vadd.f32 %v137, %v140
    %vm142 = vweird.f32 %v91
    %vm143 = vweird.f32 %v137
    %vm144 = vmor %vm142, %vm143
    %v145 = vsel %vm144, %v137, %v141
    %v146 = vand.u32 2147483647, %v91
    %vm147 = vcmp.eq.f32.partialorder %v146, 8.507059e+37
    %v148 = vand.u32 %v91, 2147483648
    %v149 = vor.u32 1.1754944e-38, %v148
    %v150 = vsel %vm147, %v149, %v145
    %v151 = vmul.f32 1.0, %v150
    %152 = vst [vmem:[#allocation8] sm:$0xff] %v106
    %153 = vst [vmem:[#allocation8 + $0x8] sm:$0xff] %v121
    %154 = vst [vmem:[#allocation8 + $0x10] sm:$0xff] %v136
    %155 = vst [vmem:[#allocation8 + $0x18] sm:$0xff] %v151
    // Predicated region
    $region22: #{tpu_custom_call.1} parent=1 // pred_check
      _
    $region23: #{tpu_custom_call.1} parent=1 // pred_check_branch
      %157 = sbr.rel (0) target = $region25
    $region24: #{tpu_custom_call.1} parent=1 // pred_region
      %159 = vsyncadd [#allocation5], 0
      %s161 = sshll.u32 [#allocation8], 4
      %s162 = int_to_ptr.vmem [resolvable:$true] %s161
      %s163 = sshll.u32 %s3, 4
      %s164 = int_to_ptr.hbm [resolvable:$true] %s163
      %166 = dma.vmem_to_hbm [thread:$0]  %s162, 512, %s164, [#allocation5]
    $region25: #{tpu_custom_call.1} parent=1 // pred_fallthru
      _
    // Predicated region
    $region26: #{tpu_custom_call.1} parent=1 // pred_check
      _
    $region27: #{tpu_custom_call.1} parent=1 // pred_check_branch
      %168 = sbr.rel (0) target = $region29
    $region28: #{tpu_custom_call.1} parent=1 // pred_region
      %170 = dma.done [#allocation5], 512
    $region29: #{tpu_custom_call.1} parent=1 // pred_fallthru
      _
    %171 = vsyncpa [#allocation4], 1
    %172 = vsyncpa [#allocation5], 1
    %173 = vsyncpa [#allocation6], 1

</llo_original>
